<compile_context>
chip_gen: v7x
topology: tpu7x:2x2x1
jax: 0.10.0
libtpu: 0.0.40
codegen_flags: <defaults>
</compile_context>

<pallas_src>
import functools
from typing import NamedTuple, Tuple

import jax
import jax.numpy as jnp
import numpy as np
from jax.experimental import pallas as pl
from jax.experimental.pallas import tpu as pltpu

_LANE = 128    # lane width: feature-dim padding target
_SUBLANE = 8   # f32 sublane: batch-dim padding target


def _round_up(x, m):
    return ((x + m - 1) // m) * m


def _vmem_capacity_bytes():
    """Generation-aware VMEM capacity; conservative v7x default if unknown."""
    try:
        info = pltpu.get_tpu_info()
        cap = getattr(info, "vmem_capacity_bytes", None)
        if cap:
            return int(cap)
    except Exception:
        pass
    return 64 * 2 ** 20


class PreparedMLP(NamedTuple):
    weights: Tuple[jnp.ndarray, ...]   # each (k_pad_i, n_pad_i), compute dtype
    bias_packed: jnp.ndarray           # (L, max_n_pad) float32
    in_dims: Tuple[int, ...]
    out_dims: Tuple[int, ...]
    k_pads: Tuple[int, ...]
    n_pads: Tuple[int, ...]


def prepare_mlp_params(params, compute_dtype=jnp.bfloat16):
    """One-time prep: transpose PyTorch (out, in) weights to (in, out),
    zero-pad both dims to 128 multiples, store in the MXU compute dtype,
    and pack all biases into a single (L, max_n_pad) f32 array."""
    weights, in_dims, out_dims, k_pads, n_pads = [], [], [], [], []
    for w, b in params:
        n_out, n_in = w.shape
        k_pad = _round_up(n_in, _LANE)
        n_pad = _round_up(n_out, _LANE)
        w_t = jnp.zeros((k_pad, n_pad), compute_dtype)
        w_t = w_t.at[:n_in, :n_out].set(jnp.asarray(w).astype(compute_dtype).T)
        weights.append(w_t)
        in_dims.append(n_in)
        out_dims.append(n_out)
        k_pads.append(k_pad)
        n_pads.append(n_pad)
    max_n_pad = max(n_pads)
    bias_packed = jnp.zeros((len(params), max_n_pad), jnp.float32)
    for i, (_, b) in enumerate(params):
        bias_packed = bias_packed.at[i, :out_dims[i]].set(
            jnp.asarray(b).astype(jnp.float32))
    return PreparedMLP(tuple(weights), bias_packed, tuple(in_dims),
                       tuple(out_dims), tuple(k_pads), tuple(n_pads))


# --------------------------------------------------------------------------
# Fused path: all layers in one kernel, weights VMEM-resident.
# --------------------------------------------------------------------------

def _fused_mlp_kernel(x_ref, *refs, n_layers, n_pads, compute_dtype):
    """refs = (w_0..w_{L-1}, bias_packed, o_ref); weights pre-transposed,
    padded and already in compute dtype. Activations stay in VMEM/vregs."""
    o_ref = refs[-1]
    b_ref = refs[n_layers]
    w_refs = refs[:n_layers]
    h = x_ref[...]
    for i in range(n_layers):
        y = jnp.dot(h.astype(compute_dtype), w_refs[i][...],
                    preferred_element_type=jnp.float32)
        y = y + b_ref[i:i + 1, :n_pads[i]]          # f32 bias add
        if i != n_layers - 1:
            y = jnp.maximum(y, 0.0)                 # relu, f32 VPU
        h = y
    o_ref[...] = h.astype(o_ref.dtype)


def _fused_forward(x2, prep: PreparedMLP, vmem_budget):
    B, k0 = x2.shape
    L = len(prep.weights)
    k0_pad = prep.k_pads[0]
    n_out = prep.out_dims[-1]
    n_out_pad = prep.n_pads[-1]
    compute_dtype = prep.weights[0].dtype

    w_bytes = sum(int(np.prod(w.shape)) * w.dtype.itemsize for w in prep.weights)
    b_bytes = int(np.prod(prep.bias_packed.shape)) * 4
    x_item = x2.dtype.itemsize
    max_width = max([k0_pad] + list(prep.n_pads))

    def vmem_est(tm):
        est = 2 * tm * k0_pad * x_item            # double-buffered x tiles
        est += 2 * tm * n_out_pad * x_item        # double-buffered out tiles
        est += w_bytes + b_bytes                  # Buffered(1): weights counted once
        est += 3 * tm * max_width * 4             # live f32 activations / results
        return est

    # Batch tile: one sublane-aligned tile for small B, else the largest of
    # {512, 256, 128} rows that fits the generation-aware VMEM budget.
    if B <= 512:
        tm = _round_up(B, _SUBLANE)
    else:
        tm = 128
        for cand in (512, 256, 128):
            if vmem_est(cand) <= vmem_budget:
                tm = cand
                break
    if vmem_est(tm) > vmem_budget:
        return None          # weights too wide to stay resident -> fallback

    m_pad = _round_up(B, tm)
    if B == m_pad and k0 == k0_pad:
        x_in = x2            # aligned fast path: no wrapper-side pad copy
    else:
        x_in = jnp.zeros((m_pad, k0_pad), x2.dtype).at[:B, :k0].set(x2)

    in_specs = [pl.BlockSpec((tm, k0_pad), lambda i: (i, 0))]
    for w in prep.weights:   # constant index_map + single buffer: VMEM-resident
        in_specs.append(pl.BlockSpec(w.shape, lambda i: (0, 0),
                                     pipeline_mode=pl.Buffered(1)))
    in_specs.append(pl.BlockSpec(prep.bias_packed.shape, lambda i: (0, 0),
                                 pipeline_mode=pl.Buffered(1)))

    kernel = functools.partial(_fused_mlp_kernel, n_layers=L,
                               n_pads=prep.n_pads, compute_dtype=compute_dtype)
    vmem_limit = int(min(vmem_budget, max(2 * vmem_est(tm), 32 * 2 ** 20)))

    out = pl.pallas_call(
        kernel,
        out_shape=jax.ShapeDtypeStruct((m_pad, n_out_pad), x2.dtype),
        grid=(m_pad // tm,),
        in_specs=in_specs,
        out_specs=pl.BlockSpec((tm, n_out_pad), lambda i: (i, 0)),
        compiler_params=pltpu.CompilerParams(
            dimension_semantics=("parallel",),
            vmem_limit_bytes=vmem_limit,
        ),
    )(x_in, *prep.weights, prep.bias_packed)

    if m_pad == B and n_out_pad == n_out:
        return out           # aligned fast path: no extra slice pass
    return out[:B, :n_out]


# --------------------------------------------------------------------------
# Fallback path: per-layer K/N-tiled matmul + bias (+relu) with f32 accumulator.
# Used when all weights cannot stay VMEM-resident (earliest on v7x's 64 MiB).
# --------------------------------------------------------------------------

def _linear_kernel(x_ref, w_ref, b_ref, o_ref, acc_ref, *, apply_relu):
    k = pl.program_id(2)

    @pl.when(k == 0)
    def _():
        acc_ref[...] = jnp.zeros_like(acc_ref)

    acc_ref[...] += jnp.dot(x_ref[...].astype(w_ref.dtype), w_ref[...],
                            preferred_element_type=jnp.float32)

    @pl.when(k == pl.num_programs(2) - 1)
    def _():
        y = acc_ref[...] + b_ref[...]
        if apply_relu:
            y = jnp.maximum(y, 0.0)
        o_ref[...] = y.astype(o_ref.dtype)


def _pick_tile(dim_pad, cap):
    for cand in (512, 256, 128):
        if cand <= cap and dim_pad % cand == 0:
            return cand
    return 128   # dim_pad is always a multiple of 128


def _layerwise_forward(x2, prep: PreparedMLP, vmem_budget):
    B, k0 = x2.shape
    out_dtype = x2.dtype
    tm = 256 if B >= 256 else _round_up(B, _SUBLANE)
    m_pad = _round_up(B, tm)
    k0_pad = prep.k_pads[0]

    if B == m_pad and k0 == k0_pad:
        h = x2
    else:
        h = jnp.zeros((m_pad, k0_pad), out_dtype).at[:B, :k0].set(x2)

    L = len(prep.weights)
    for li, w in enumerate(prep.weights):
        k_pad, n_pad = w.shape
        b = prep.bias_packed[li:li + 1, :n_pad]
        tk = _pick_tile(k_pad, 512)
        tn = _pick_tile(n_pad, 256)
        kernel = functools.partial(_linear_kernel, apply_relu=(li != L - 1))
        h = pl.pallas_call(
            kernel,
            out_shape=jax.ShapeDtypeStruct((m_pad, n_pad), out_dtype),
            grid=(m_pad // tm, n_pad // tn, k_pad // tk),
            in_specs=[pl.BlockSpec((tm, tk), lambda i, j, k: (i, k)),
                      pl.BlockSpec((tk, tn), lambda i, j, k: (k, j)),
                      pl.BlockSpec((1, tn), lambda i, j, k: (0, j))],
            out_specs=pl.BlockSpec((tm, tn), lambda i, j, k: (i, j)),
            scratch_shapes=[pltpu.VMEM((tm, tn), jnp.float32)],
            compiler_params=pltpu.CompilerParams(
                dimension_semantics=("parallel", "parallel", "arbitrary"),
                vmem_limit_bytes=int(min(vmem_budget, 64 * 2 ** 20)),
            ),
        )(h, w, b)

    n_out = prep.out_dims[-1]
    n_out_pad = prep.n_pads[-1]
    if m_pad == B and n_out_pad == n_out:
        return h
    return h[:B, :n_out]


# --------------------------------------------------------------------------

def mlp_forward(x, prep: PreparedMLP, force_layerwise=False):
    """MLP.forward: flatten non-batch dims, run the fused Pallas MLP kernel
    (or the K/N-tiled layer-wise fallback when weights exceed VMEM budget)."""
    B = x.shape[0]
    k0 = int(np.prod(x.shape[1:]))
    assert k0 == prep.in_dims[0], (k0, prep.in_dims[0])
    x2 = x.reshape(B, k0)

    vmem_budget = int(0.75 * _vmem_capacity_bytes())  # ~48 MiB v7x, ~96 MiB v5e/v6e

    if not force_layerwise:
        out = _fused_forward(x2, prep, vmem_budget)
        if out is not None:
            return out
    return _layerwise_forward(x2, prep, vmem_budget)


def init_mlp_params(key, n_inputs, n_hidden_units, n_outputs):
    """PyTorch-default Linear init: U(-1/sqrt(fan_in), 1/sqrt(fan_in)).
    (nl='relu' is not in `initializers` and initialization=None, so the
    PyTorch module keeps torch.nn.Linear's default init.)"""
    params = []
    dims = [n_inputs] + list(n_hidden_units) + [n_outputs]
    for fan_in, fan_out in zip(dims[:-1], dims[1:]):
        key, kw, kb = jax.random.split(key, 3)
        bound = 1.0 / np.sqrt(fan_in)
        w = jax.random.uniform(kw, (fan_out, fan_in), jnp.float32, -bound, bound)
        b = jax.random.uniform(kb, (fan_out,), jnp.float32, -bound, bound)
        params.append((w, b))
    return params


if __name__ == "__main__":
    # Small shapes: batch=2, channels=4, spatial=16x16 -> n_inputs = 1024
    B, C, H, W = 2, 4, 16, 16
    n_inputs = C * H * W
    n_hidden_units = (32, 32)
    n_outputs = 8

    key = jax.random.PRNGKey(0)
    key, kx = jax.random.split(key)
    x = jax.random.normal(kx, (B, C, H, W), jnp.float32)

    params = init_mlp_params(key, n_inputs, n_hidden_units, n_outputs)

    def reference(xx):   # pure-JAX f32 reference of the same forward semantics
        xr = xx.reshape(xx.shape[0], -1)
        for i, (w, b) in enumerate(params):
            xr = xr @ w.T + b
            if i != len(params) - 1:
                xr = jnp.maximum(xr, 0.0)
        return xr

    ref_small = np.asarray(reference(x))

    # 1) exact-precision fused path (f32 weights / f32 MXU inputs, f32 acc)
    prep_f32 = prepare_mlp_params(params, compute_dtype=jnp.float32)
    out_f32 = jax.block_until_ready(jax.jit(lambda xx: mlp_forward(xx, prep_f32))(x))
    assert out_f32.shape == (B, n_outputs)
    np.testing.assert_allclose(np.asarray(out_f32), ref_small, rtol=1e-5, atol=1e-5)

    # 2) default fast path: bf16-stored weights, bf16 MXU inputs, f32 accumulate
    prep_bf16 = prepare_mlp_params(params, compute_dtype=jnp.bfloat16)
    out_bf16 = jax.block_until_ready(jax.jit(lambda xx: mlp_forward(xx, prep_bf16))(x))
    np.testing.assert_allclose(np.asarray(out_bf16), ref_small, rtol=5e-2, atol=5e-2)

    # 3) multi-tile batch grid (exercises tm=512 tiling, batch padding and
    #    single-buffered VMEM-resident weights across grid steps)
    Bb = 600
    key, kb = jax.random.split(key)
    xb = jax.random.normal(kb, (Bb, C, H, W), jnp.float32)
    ref_big = np.asarray(reference(xb))
    out_big = jax.block_until_ready(jax.jit(lambda xx: mlp_forward(xx, prep_f32))(xb))
    assert out_big.shape == (Bb, n_outputs)
    np.testing.assert_allclose(np.asarray(out_big), ref_big, rtol=1e-5, atol=1e-5)

    # 4) K/N-tiled layer-wise fallback (used when weights exceed VMEM budget)
    out_lw = jax.block_until_ready(
        jax.jit(lambda xx: mlp_forward(xx, prep_f32, force_layerwise=True))(x))
    np.testing.assert_allclose(np.asarray(out_lw), ref_small, rtol=1e-4, atol=1e-4)

    print("KERNEL_OK")
</pallas_src>

<mosaic_0001>
module attributes {stable_mosaic.version = 11 : i64} {
  func.func @_fused_mlp_kernel(%arg0: i32, %arg1: memref<8x1024xf32, #tpu.memory_space<vmem>>, %arg2: memref<1024x128xf32, #tpu.memory_space<vmem>>, %arg3: memref<128x128xf32, #tpu.memory_space<vmem>>, %arg4: memref<128x128xf32, #tpu.memory_space<vmem>>, %arg5: memref<3x128xf32, #tpu.memory_space<vmem>>, %arg6: memref<8x128xf32, #tpu.memory_space<vmem>>) attributes {dimension_semantics = [#tpu.dimension_semantics<parallel>], iteration_bounds = array<i64: 1>, scalar_prefetch = 0 : i64, scratch_operands = 0 : i64, tpu.core_type = #tpu.core_type<tc>, window_params = [{transform_indices = @transform_0, window_bounds = array<i64: 8, 1024>}, {pipeline_mode = #tpu.pipeline_mode<synchronous>, transform_indices = @transform_1, window_bounds = array<i64: 1024, 128>}, {pipeline_mode = #tpu.pipeline_mode<synchronous>, transform_indices = @transform_2, window_bounds = array<i64: 128, 128>}, {pipeline_mode = #tpu.pipeline_mode<synchronous>, transform_indices = @transform_3, window_bounds = array<i64: 128, 128>}, {pipeline_mode = #tpu.pipeline_mode<synchronous>, transform_indices = @transform_4, window_bounds = array<i64: 3, 128>}, {transform_indices = @transform_5, window_bounds = array<i64: 8, 128>}]} {
    %c0 = arith.constant 0 : index
    %c0_0 = arith.constant 0 : index
    %0 = vector.load %arg1[%c0, %c0_0] : memref<8x1024xf32, #tpu.memory_space<vmem>>, vector<8x1024xf32>
    %c0_1 = arith.constant 0 : index
    %c0_2 = arith.constant 0 : index
    %1 = vector.load %arg2[%c0_1, %c0_2] : memref<1024x128xf32, #tpu.memory_space<vmem>>, vector<1024x128xf32>
    %cst = arith.constant dense<0.000000e+00> : vector<8x128xf32>
    %2 = tpu.matmul %0, %1, %cst {dimension_numbers = #tpu.dot_dimension_numbers<[1], [0], [0], [1], [0, 0, 1, 1], [], []>} : vector<8x1024xf32>, vector<1024x128xf32>, vector<8x128xf32> -> vector<8x128xf32>
    %c0_3 = arith.constant 0 : index
    %c0_4 = arith.constant 0 : index
    %3 = vector.load %arg5[%c0_3, %c0_4] : memref<3x128xf32, #tpu.memory_space<vmem>>, vector<1x128xf32>
    %4 = vector.broadcast %3 : vector<1x128xf32> to vector<8x128xf32>
    %5 = arith.addf %2, %4 : vector<8x128xf32>
    %cst_5 = arith.constant 0.000000e+00 : f32
    %6 = vector.broadcast %cst_5 : f32 to vector<8x128xf32>
    %7 = arith.maximumf %5, %6 : vector<8x128xf32>
    %c0_6 = arith.constant 0 : index
    %c0_7 = arith.constant 0 : index
    %8 = vector.load %arg3[%c0_6, %c0_7] : memref<128x128xf32, #tpu.memory_space<vmem>>, vector<128x128xf32>
    %cst_8 = arith.constant dense<0.000000e+00> : vector<8x128xf32>
    %9 = tpu.matmul %7, %8, %cst_8 {dimension_numbers = #tpu.dot_dimension_numbers<[1], [0], [0], [1], [0, 0, 1, 1], [], []>} : vector<8x128xf32>, vector<128x128xf32>, vector<8x128xf32> -> vector<8x128xf32>
    %c1 = arith.constant 1 : index
    %c0_9 = arith.constant 0 : index
    %10 = vector.load %arg5[%c1, %c0_9] : memref<3x128xf32, #tpu.memory_space<vmem>>, vector<1x128xf32>
    %11 = vector.broadcast %10 : vector<1x128xf32> to vector<8x128xf32>
    %12 = arith.addf %9, %11 : vector<8x128xf32>
    %cst_10 = arith.constant 0.000000e+00 : f32
    %13 = vector.broadcast %cst_10 : f32 to vector<8x128xf32>
    %14 = arith.maximumf %12, %13 : vector<8x128xf32>
    %c0_11 = arith.constant 0 : index
    %c0_12 = arith.constant 0 : index
    %15 = vector.load %arg4[%c0_11, %c0_12] : memref<128x128xf32, #tpu.memory_space<vmem>>, vector<128x128xf32>
    %cst_13 = arith.constant dense<0.000000e+00> : vector<8x128xf32>
    %16 = tpu.matmul %14, %15, %cst_13 {dimension_numbers = #tpu.dot_dimension_numbers<[1], [0], [0], [1], [0, 0, 1, 1], [], []>} : vector<8x128xf32>, vector<128x128xf32>, vector<8x128xf32> -> vector<8x128xf32>
    %c2 = arith.constant 2 : index
    %c0_14 = arith.constant 0 : index
    %17 = vector.load %arg5[%c2, %c0_14] : memref<3x128xf32, #tpu.memory_space<vmem>>, vector<1x128xf32>
    %18 = vector.broadcast %17 : vector<1x128xf32> to vector<8x128xf32>
    %19 = arith.addf %16, %18 : vector<8x128xf32>
    %c0_15 = arith.constant 0 : index
    %c0_16 = arith.constant 0 : index
    %20 = vector.load %arg6[%c0_15, %c0_16] : memref<8x128xf32, #tpu.memory_space<vmem>>, vector<8x128xf32>
    tpu.vector_store %arg6[%c0_15, %c0_16], %19 {strides = array<i32>} : memref<8x128xf32, #tpu.memory_space<vmem>>, vector<8x128xf32>,
    return
  }
  func.func @transform_0(%arg0: i32) -> (i32, i32) {
    %c0_i32 = arith.constant 0 : i32
    %c0_i32_0 = arith.constant 0 : i32
    return %arg0, %c0_i32 : i32, i32
  }
  func.func @transform_1(%arg0: i32) -> (i32, i32) {
    %c0_i32 = arith.constant 0 : i32
    %c0_i32_0 = arith.constant 0 : i32
    %c0_i32_1 = arith.constant 0 : i32
    return %c0_i32, %c0_i32_0 : i32, i32
  }
  func.func @transform_2(%arg0: i32) -> (i32, i32) {
    %c0_i32 = arith.constant 0 : i32
    %c0_i32_0 = arith.constant 0 : i32
    %c0_i32_1 = arith.constant 0 : i32
    return %c0_i32, %c0_i32_0 : i32, i32
  }
  func.func @transform_3(%arg0: i32) -> (i32, i32) {
    %c0_i32 = arith.constant 0 : i32
    %c0_i32_0 = arith.constant 0 : i32
    %c0_i32_1 = arith.constant 0 : i32
    return %c0_i32, %c0_i32_0 : i32, i32
  }
  func.func @transform_4(%arg0: i32) -> (i32, i32) {
    %c0_i32 = arith.constant 0 : i32
    %c0_i32_0 = arith.constant 0 : i32
    %c0_i32_1 = arith.constant 0 : i32
    return %c0_i32, %c0_i32_0 : i32, i32
  }
  func.func @transform_5(%arg0: i32) -> (i32, i32) {
    %c0_i32 = arith.constant 0 : i32
    %c0_i32_0 = arith.constant 0 : i32
    return %arg0, %c0_i32 : i32, i32
  }
}

</mosaic_0001>

<llo_original>
// kernel: _lambda_.1
$region0: #{_lambda_.1}
  #allocation0 [shape = 'u32[]', space=smem, size = 0x4, offset = 0x4, fixed_abs, tag = 'smem constant byte address 0x4 - core index']
  #allocation1 [shape = 'u32[144,128]{1,0:T(1,128)}', space=vmem, size = 0x12000, scoped, tag = 'internal scratch']
  %s0 = inlined_call_operand.vmem [shape: f32[8,1024], index: 0, kind: input, shape index: {}]
  %s1 = inlined_call_operand.hbm [shape: f32[1024,128], index: 1, kind: input, shape index: {}]
  %s2 = inlined_call_operand.hbm [shape: f32[128,128], index: 2, kind: input, shape index: {}]
  %s3 = inlined_call_operand.vmem [shape: f32[128,128], index: 3, kind: input, shape index: {}]
  %s4 = inlined_call_operand.vmem [shape: f32[3,128], index: 4, kind: input, shape index: {}]
  %s5 = inlined_call_operand.vmem [shape: f32[8,128], index: 5, kind: output, shape index: {}]
  %s6 = sld [smem:[#allocation0]]
  $region38: #{_lambda_.1} parent=0
    _
  %s8 = ssub.s32 1, %s6
  %s9 = scalar_select 0, %s8, %s6
  $region1: #{_lambda_.1} parent=0
    #allocation2 [shape = 'u8[524288]{0}', space=vmem, size = 0x80000, scoped, tag = 'input window, operand 1, single buffered']
    #allocation3 [shape = 's32[1]{0}', space=sflag, size = 0x4, scoped, tag = 'scoped memory for _lambda_.1']
    #allocation4 [shape = 'u8[65536]{0}', space=vmem, size = 0x10000, scoped, tag = 'input window, operand 2, single buffered']
    #allocation5 [shape = 's32[1]{0}', space=sflag, size = 0x4, scoped, tag = 'scoped memory for _lambda_.1']
    %10 = vsyncpa [#allocation3], 0
    %11 = vsyncpa [#allocation5], 0
    // Predicated region
    $region2: #{_lambda_.1} parent=1 // pred_check
      _
    $region3: #{_lambda_.1} parent=1 // pred_check_branch
      %13 = sbr.rel (0) target = $region5
    $region4: #{_lambda_.1} parent=1 // pred_region
      _
    $region5: #{_lambda_.1} parent=1 // pred_fallthru
      _
    // Predicated region
    $region6: #{_lambda_.1} parent=1 // pred_check
      _
    $region7: #{_lambda_.1} parent=1 // pred_check_branch
      %15 = sbr.rel (0) target = $region9
    $region8: #{_lambda_.1} parent=1 // pred_region
      %s17 = ssub.s32 16384, 16384
      %18 = vsyncadd [#allocation3], %s17
      %s19 = sshll.u32 [#allocation2], 4
      %s20 = int_to_ptr.vmem [resolvable:$true] %s19
      %25 = dma.hbm_to_vmem [thread:$0]  %s1, 16384, %s20, [#allocation3], 128, 128, 8
    $region9: #{_lambda_.1} parent=1 // pred_fallthru
      _
    // Predicated region
    $region10: #{_lambda_.1} parent=1 // pred_check
      _
    $region11: #{_lambda_.1} parent=1 // pred_check_branch
      %27 = sbr.rel (0) target = $region13
    $region12: #{_lambda_.1} parent=1 // pred_region
      %s29 = ssub.s32 2048, 2048
      %30 = vsyncadd [#allocation5], %s29
      %s31 = sshll.u32 [#allocation4], 4
      %s32 = int_to_ptr.vmem [resolvable:$true] %s31
      %37 = dma.hbm_to_vmem [thread:$0]  %s2, 2048, %s32, [#allocation5], 128, 128, 8
    $region13: #{_lambda_.1} parent=1 // pred_fallthru
      _
    // Predicated region
    $region14: #{_lambda_.1} parent=1 // pred_check
      _
    $region15: #{_lambda_.1} parent=1 // pred_check_branch
      %39 = sbr.rel (0) target = $region17
    $region16: #{_lambda_.1} parent=1 // pred_region
      _
    $region17: #{_lambda_.1} parent=1 // pred_fallthru
      _
    // Predicated region
    $region18: #{_lambda_.1} parent=1 // pred_check
      _
    $region19: #{_lambda_.1} parent=1 // pred_check_branch
      %41 = sbr.rel (0) target = $region21
    $region20: #{_lambda_.1} parent=1 // pred_region
      _
    $region21: #{_lambda_.1} parent=1 // pred_fallthru
      _
    // Predicated region
    $region22: #{_lambda_.1} parent=1 // pred_check
      _
    $region23: #{_lambda_.1} parent=1 // pred_check_branch
      %43 = sbr.rel (0) target = $region25
    $region24: #{_lambda_.1} parent=1 // pred_region
      %44 = dma.done [#allocation3], 16384
    $region25: #{_lambda_.1} parent=1 // pred_fallthru
      _
    // Predicated region
    $region26: #{_lambda_.1} parent=1 // pred_check
      _
    $region27: #{_lambda_.1} parent=1 // pred_check_branch
      %46 = sbr.rel (0) target = $region29
    $region28: #{_lambda_.1} parent=1 // pred_region
      %47 = dma.done [#allocation5], 2048
    $region29: #{_lambda_.1} parent=1 // pred_fallthru
      _
    %v48 = vld [vmem:[%s0] sm:$0xff]
    %v49 = vld [vmem:[%s0 + $0x8] sm:$0xff]
    %v50 = vld [vmem:[%s0 + $0x10] sm:$0xff]
    %v51 = vld [vmem:[%s0 + $0x18] sm:$0xff]
    %v52 = vld [vmem:[%s0 + $0x20] sm:$0xff]
    %v53 = vld [vmem:[%s0 + $0x28] sm:$0xff]
    %v54 = vld [vmem:[%s0 + $0x30] sm:$0xff]
    %v55 = vld [vmem:[%s0 + $0x38] sm:$0xff]
    %v56 = vld [vmem:[#allocation2] sm:$0xff]
    %v57 = vld [vmem:[#allocation2 + $0x8] sm:$0xff]
    %v58 = vld [vmem:[#allocation2 + $0x10] sm:$0xff]
    %v59 = vld [vmem:[#allocation2 + $0x18] sm:$0xff]
    %v60 = vld [vmem:[#allocation2 + $0x20] sm:$0xff]
    %v61 = vld [vmem:[#allocation2 + $0x28] sm:$0xff]
    %v62 = vld [vmem:[#allocation2 + $0x30] sm:$0xff]
    %v63 = vld [vmem:[#allocation2 + $0x38] sm:$0xff]
    %v64 = vld [vmem:[#allocation2 + $0x40] sm:$0xff]
    %v65 = vld [vmem:[#allocation2 + $0x48] sm:$0xff]
    %v66 = vld [vmem:[#allocation2 + $0x50] sm:$0xff]
    %v67 = vld [vmem:[#allocation2 + $0x58] sm:$0xff]
    %v68 = vld [vmem:[#allocation2 + $0x60] sm:$0xff]
    %v69 = vld [vmem:[#allocation2 + $0x68] sm:$0xff]
    %v70 = vld [vmem:[#allocation2 + $0x70] sm:$0xff]
    %v71 = vld [vmem:[#allocation2 + $0x78] sm:$0xff]
    %v72 = vld [vmem:[#allocation2 + $0x80] sm:$0xff]
    %v73 = vld [vmem:[#allocation2 + $0x88] sm:$0xff]
    %v74 = vld [vmem:[#allocation2 + $0x90] sm:$0xff]
    %v75 = vld [vmem:[#allocation2 + $0x98] sm:$0xff]
    %v76 = vld [vmem:[#allocation2 + $0xa0] sm:$0xff]
    %v77 = vld [vmem:[#allocation2 + $0xa8] sm:$0xff]
    %v78 = vld [vmem:[#allocation2 + $0xb0] sm:$0xff]
    %v79 = vld [vmem:[#allocation2 + $0xb8] sm:$0xff]
    %v80 = vld [vmem:[#allocation2 + $0xc0] sm:$0xff]
    %v81 = vld [vmem:[#allocation2 + $0xc8] sm:$0xff]
    %v82 = vld [vmem:[#allocation2 + $0xd0] sm:$0xff]
    %v83 = vld [vmem:[#allocation2 + $0xd8] sm:$0xff]
    %v84 = vld [vmem:[#allocation2 + $0xe0] sm:$0xff]
    %v85 = vld [vmem:[#allocation2 + $0xe8] sm:$0xff]
    %v86 = vld [vmem:[#allocation2 + $0xf0] sm:$0xff]
    %v87 = vld [vmem:[#allocation2 + $0xf8] sm:$0xff]
    %v88 = vld [vmem:[#allocation2 + $0x100] sm:$0xff]
    %v89 = vld [vmem:[#allocation2 + $0x108] sm:$0xff]
    %v90 = vld [vmem:[#allocation2 + $0x110] sm:$0xff]
    %v91 = vld [vmem:[#allocation2 + $0x118] sm:$0xff]
    %v92 = vld [vmem:[#allocation2 + $0x120] sm:$0xff]
    %v93 = vld [vmem:[#allocation2 + $0x128] sm:$0xff]
    %v94 = vld [vmem:[#allocation2 + $0x130] sm:$0xff]
    %v95 = vld [vmem:[#allocation2 + $0x138] sm:$0xff]
    %v96 = vld [vmem:[#allocation2 + $0x140] sm:$0xff]
    %v97 = vld [vmem:[#allocation2 + $0x148] sm:$0xff]
    %v98 = vld [vmem:[#allocation2 + $0x150] sm:$0xff]
    %v99 = vld [vmem:[#allocation2 + $0x158] sm:$0xff]
    %v100 = vld [vmem:[#allocation2 + $0x160] sm:$0xff]
    %v101 = vld [vmem:[#allocation2 + $0x168] sm:$0xff]
    %v102 = vld [vmem:[#allocation2 + $0x170] sm:$0xff]
    %v103 = vld [vmem:[#allocation2 + $0x178] sm:$0xff]
    %v104 = vld [vmem:[#allocation2 + $0x180] sm:$0xff]
    %v105 = vld [vmem:[#allocation2 + $0x188] sm:$0xff]
    %v106 = vld [vmem:[#allocation2 + $0x190] sm:$0xff]
    %v107 = vld [vmem:[#allocation2 + $0x198] sm:$0xff]
    %v108 = vld [vmem:[#allocation2 + $0x1a0] sm:$0xff]
    %v109 = vld [vmem:[#allocation2 + $0x1a8] sm:$0xff]
    %v110 = vld [vmem:[#allocation2 + $0x1b0] sm:$0xff]
    %v111 = vld [vmem:[#allocation2 + $0x1b8] sm:$0xff]
    %v112 = vld [vmem:[#allocation2 + $0x1c0] sm:$0xff]
    %v113 = vld [vmem:[#allocation2 + $0x1c8] sm:$0xff]
    %v114 = vld [vmem:[#allocation2 + $0x1d0] sm:$0xff]
    %v115 = vld [vmem:[#allocation2 + $0x1d8] sm:$0xff]
    %v116 = vld [vmem:[#allocation2 + $0x1e0] sm:$0xff]
    %v117 = vld [vmem:[#allocation2 + $0x1e8] sm:$0xff]
    %v118 = vld [vmem:[#allocation2 + $0x1f0] sm:$0xff]
    %v119 = vld [vmem:[#allocation2 + $0x1f8] sm:$0xff]
    %v120 = vld [vmem:[#allocation2 + $0x200] sm:$0xff]
    %v121 = vld [vmem:[#allocation2 + $0x208] sm:$0xff]
    %v122 = vld [vmem:[#allocation2 + $0x210] sm:$0xff]
    %v123 = vld [vmem:[#allocation2 + $0x218] sm:$0xff]
    %v124 = vld [vmem:[#allocation2 + $0x220] sm:$0xff]
    %v125 = vld [vmem:[#allocation2 + $0x228] sm:$0xff]
    %v126 = vld [vmem:[#allocation2 + $0x230] sm:$0xff]
    %v127 = vld [vmem:[#allocation2 + $0x238] sm:$0xff]
    %v128 = vld [vmem:[#allocation2 + $0x240] sm:$0xff]
    %v129 = vld [vmem:[#allocation2 + $0x248] sm:$0xff]
    %v130 = vld [vmem:[#allocation2 + $0x250] sm:$0xff]
    %v131 = vld [vmem:[#allocation2 + $0x258] sm:$0xff]
    %v132 = vld [vmem:[#allocation2 + $0x260] sm:$0xff]
    %v133 = vld [vmem:[#allocation2 + $0x268] sm:$0xff]
    %v134 = vld [vmem:[#allocation2 + $0x270] sm:$0xff]
    %v135 = vld [vmem:[#allocation2 + $0x278] sm:$0xff]
    %v136 = vld [vmem:[#allocation2 + $0x280] sm:$0xff]
    %v137 = vld [vmem:[#allocation2 + $0x288] sm:$0xff]
    %v138 = vld [vmem:[#allocation2 + $0x290] sm:$0xff]
    %v139 = vld [vmem:[#allocation2 + $0x298] sm:$0xff]
    %v140 = vld [vmem:[#allocation2 + $0x2a0] sm:$0xff]
    %v141 = vld [vmem:[#allocation2 + $0x2a8] sm:$0xff]
    %v142 = vld [vmem:[#allocation2 + $0x2b0] sm:$0xff]
    %v143 = vld [vmem:[#allocation2 + $0x2b8] sm:$0xff]
    %v144 = vld [vmem:[#allocation2 + $0x2c0] sm:$0xff]
    %v145 = vld [vmem:[#allocation2 + $0x2c8] sm:$0xff]
    %v146 = vld [vmem:[#allocation2 + $0x2d0] sm:$0xff]
    %v147 = vld [vmem:[#allocation2 + $0x2d8] sm:$0xff]
    %v148 = vld [vmem:[#allocation2 + $0x2e0] sm:$0xff]
    %v149 = vld [vmem:[#allocation2 + $0x2e8] sm:$0xff]
    %v150 = vld [vmem:[#allocation2 + $0x2f0] sm:$0xff]
    %v151 = vld [vmem:[#allocation2 + $0x2f8] sm:$0xff]
    %v152 = vld [vmem:[#allocation2 + $0x300] sm:$0xff]
    %v153 = vld [vmem:[#allocation2 + $0x308] sm:$0xff]
    %v154 = vld [vmem:[#allocation2 + $0x310] sm:$0xff]
    %v155 = vld [vmem:[#allocation2 + $0x318] sm:$0xff]
    %v156 = vld [vmem:[#allocation2 + $0x320] sm:$0xff]
    %v157 = vld [vmem:[#allocation2 + $0x328] sm:$0xff]
    %v158 = vld [vmem:[#allocation2 + $0x330] sm:$0xff]
    %v159 = vld [vmem:[#allocation2 + $0x338] sm:$0xff]
    %v160 = vld [vmem:[#allocation2 + $0x340] sm:$0xff]
    %v161 = vld [vmem:[#allocation2 + $0x348] sm:$0xff]
    %v162 = vld [vmem:[#allocation2 + $0x350] sm:$0xff]
    %v163 = vld [vmem:[#allocation2 + $0x358] sm:$0xff]
    %v164 = vld [vmem:[#allocation2 + $0x360] sm:$0xff]
    %v165 = vld [vmem:[#allocation2 + $0x368] sm:$0xff]
    %v166 = vld [vmem:[#allocation2 + $0x370] sm:$0xff]
    %v167 = vld [vmem:[#allocation2 + $0x378] sm:$0xff]
    %v168 = vld [vmem:[#allocation2 + $0x380] sm:$0xff]
    %v169 = vld [vmem:[#allocation2 + $0x388] sm:$0xff]
    %v170 = vld [vmem:[#allocation2 + $0x390] sm:$0xff]
    %v171 = vld [vmem:[#allocation2 + $0x398] sm:$0xff]
    %v172 = vld [vmem:[#allocation2 + $0x3a0] sm:$0xff]
    %v173 = vld [vmem:[#allocation2 + $0x3a8] sm:$0xff]
    %v174 = vld [vmem:[#allocation2 + $0x3b0] sm:$0xff]
    %v175 = vld [vmem:[#allocation2 + $0x3b8] sm:$0xff]
    %v176 = vld [vmem:[#allocation2 + $0x3c0] sm:$0xff]
    %v177 = vld [vmem:[#allocation2 + $0x3c8] sm:$0xff]
    %v178 = vld [vmem:[#allocation2 + $0x3d0] sm:$0xff]
    %v179 = vld [vmem:[#allocation2 + $0x3d8] sm:$0xff]
    %v180 = vld [vmem:[#allocation2 + $0x3e0] sm:$0xff]
    %v181 = vld [vmem:[#allocation2 + $0x3e8] sm:$0xff]
    %v182 = vld [vmem:[#allocation2 + $0x3f0] sm:$0xff]
    %v183 = vld [vmem:[#allocation2 + $0x3f8] sm:$0xff]
    %v184 = vld [vmem:[%s4] sm:$0x1]
    %v185 = vlaneseq
    %v186 = vshrl.u32 %v185, 7
    %v187 = vsub.s32 0, %v186
    %v188 = vrot.slane %v184, %v187
    %189 = vmatprep.subr.mxu0 0.0
    %190 = vmatpush1.msra.mxu0 %v56
    %191 = vmatprep.subr.mxu0 0.0
    %192 = vmatpush1.msra.mxu0 %v57
    %193 = vmatprep.subr.mxu0 0.0
    %194 = vmatpush1.msra.mxu0 %v58
    %195 = vmatprep.subr.mxu0 0.0
    %196 = vmatpush1.msra.mxu0 %v59
    %197 = vmatprep.subr.mxu0 0.0
    %198 = vmatpush1.msra.mxu0 %v60
    %199 = vmatprep.subr.mxu0 0.0
    %200 = vmatpush1.msra.mxu0 %v61
    %201 = vmatprep.subr.mxu0 0.0
    %202 = vmatpush1.msra.mxu0 %v62
    %203 = vmatprep.subr.mxu0 0.0
    %204 = vmatpush1.msra.mxu0 %v63
    %205 = vmatprep.subr.mxu0 0.0
    %206 = vmatpush1.msra.mxu0 %v64
    %207 = vmatprep.subr.mxu0 0.0
    %208 = vmatpush1.msra.mxu0 %v65
    %209 = vmatprep.subr.mxu0 0.0
    %210 = vmatpush1.msra.mxu0 %v66
    %211 = vmatprep.subr.mxu0 0.0
    %212 = vmatpush1.msra.mxu0 %v67
    %213 = vmatprep.subr.mxu0 0.0
    %214 = vmatpush1.msra.mxu0 %v68
    %215 = vmatprep.subr.mxu0 0.0
    %216 = vmatpush1.msra.mxu0 %v69
    %217 = vmatprep.subr.mxu0 0.0
    %218 = vmatpush1.msra.mxu0 %v70
    %219 = vmatprep.subr.mxu0 0.0
    %220 = vmatpush1.msra.mxu0 %v71
    %221 = vmatprep.subr.mxu0 0.0
    %222 = vmatpush1.msra.mxu0 %v72
    %223 = vmatprep.subr.mxu0 0.0
    %224 = vmatpush1.msra.mxu0 %v73
    %225 = vmatprep.subr.mxu0 0.0
    %226 = vmatpush1.msra.mxu0 %v74
    %227 = vmatprep.subr.mxu0 0.0
    %228 = vmatpush1.msra.mxu0 %v75
    %229 = vmatprep.subr.mxu0 0.0
    %230 = vmatpush1.msra.mxu0 %v76
    %231 = vmatprep.subr.mxu0 0.0
    %232 = vmatpush1.msra.mxu0 %v77
    %233 = vmatprep.subr.mxu0 0.0
    %234 = vmatpush1.msra.mxu0 %v78
    %235 = vmatprep.subr.mxu0 0.0
    %236 = vmatpush1.msra.mxu0 %v79
    %237 = vmatprep.subr.mxu0 0.0
    %238 = vmatpush1.msra.mxu0 %v80
    %239 = vmatprep.subr.mxu0 0.0
    %240 = vmatpush1.msra.mxu0 %v81
    %241 = vmatprep.subr.mxu0 0.0
    %242 = vmatpush1.msra.mxu0 %v82
    %243 = vmatprep.subr.mxu0 0.0
    %244 = vmatpush1.msra.mxu0 %v83
    %245 = vmatprep.subr.mxu0 0.0
    %246 = vmatpush1.msra.mxu0 %v84
    %247 = vmatprep.subr.mxu0 0.0
    %248 = vmatpush1.msra.mxu0 %v85
    %249 = vmatprep.subr.mxu0 0.0
    %250 = vmatpush1.msra.mxu0 %v86
    %251 = vmatprep.subr.mxu0 0.0
    %252 = vmatpush1.msra.mxu0 %v87
    %253 = vmatprep.mubr.f32.mxu0 %v49
    %254 = vmatmul.mubr.f32.gmra.mrb[0].mxu0 %v48
    %v255 = vpop.f32.mrb[0].mxu0
    %v256 = vadd.f32 %v188, %v255
    %v257 = vpop.f32.mrb[0].mxu0
    %258 = vdwg.mxu0
    %259 = vmatprep.subr.mxu0 0.0
    %260 = vmatpush1.msra.mxu0 %v88
    %261 = vmatprep.subr.mxu0 0.0
    %262 = vmatpush1.msra.mxu0 %v89
    %263 = vmatprep.subr.mxu0 0.0
    %264 = vmatpush1.msra.mxu0 %v90
    %265 = vmatprep.subr.mxu0 0.0
    %266 = vmatpush1.msra.mxu0 %v91
    %267 = vmatprep.subr.mxu0 0.0
    %268 = vmatpush1.msra.mxu0 %v92
    %269 = vmatprep.subr.mxu0 0.0
    %270 = vmatpush1.msra.mxu0 %v93
    %271 = vmatprep.subr.mxu0 0.0
    %272 = vmatpush1.msra.mxu0 %v94
    %273 = vmatprep.subr.mxu0 0.0
    %274 = vmatpush1.msra.mxu0 %v95
    %275 = vmatprep.subr.mxu0 0.0
    %276 = vmatpush1.msra.mxu0 %v96
    %277 = vmatprep.subr.mxu0 0.0
    %278 = vmatpush1.msra.mxu0 %v97
    %279 = vmatprep.subr.mxu0 0.0
    %280 = vmatpush1.msra.mxu0 %v98
    %281 = vmatprep.subr.mxu0 0.0
    %282 = vmatpush1.msra.mxu0 %v99
    %283 = vmatprep.subr.mxu0 0.0
    %284 = vmatpush1.msra.mxu0 %v100
    %285 = vmatprep.subr.mxu0 0.0
    %286 = vmatpush1.msra.mxu0 %v101
    %287 = vmatprep.subr.mxu0 0.0
    %288 = vmatpush1.msra.mxu0 %v102
    %289 = vmatprep.subr.mxu0 0.0
    %290 = vmatpush1.msra.mxu0 %v103
    %291 = vmatprep.subr.mxu0 0.0
    %292 = vmatpush1.msra.mxu0 %v104
    %293 = vmatprep.subr.mxu0 0.0
    %294 = vmatpush1.msra.mxu0 %v105
    %295 = vmatprep.subr.mxu0 0.0
    %296 = vmatpush1.msra.mxu0 %v106
    %297 = vmatprep.subr.mxu0 0.0
    %298 = vmatpush1.msra.mxu0 %v107
    %299 = vmatprep.subr.mxu0 0.0
    %300 = vmatpush1.msra.mxu0 %v108
    %301 = vmatprep.subr.mxu0 0.0
    %302 = vmatpush1.msra.mxu0 %v109
    %303 = vmatprep.subr.mxu0 0.0
    %304 = vmatpush1.msra.mxu0 %v110
    %305 = vmatprep.subr.mxu0 0.0
    %306 = vmatpush1.msra.mxu0 %v111
    %307 = vmatprep.subr.mxu0 0.0
    %308 = vmatpush1.msra.mxu0 %v112
    %309 = vmatprep.subr.mxu0 0.0
    %310 = vmatpush1.msra.mxu0 %v113
    %311 = vmatprep.subr.mxu0 0.0
    %312 = vmatpush1.msra.mxu0 %v114
    %313 = vmatprep.subr.mxu0 0.0
    %314 = vmatpush1.msra.mxu0 %v115
    %315 = vmatprep.subr.mxu0 0.0
    %316 = vmatpush1.msra.mxu0 %v116
    %317 = vmatprep.subr.mxu0 0.0
    %318 = vmatpush1.msra.mxu0 %v117
    %319 = vmatprep.subr.mxu0 0.0
    %320 = vmatpush1.msra.mxu0 %v118
    %321 = vmatprep.subr.mxu0 0.0
    %322 = vmatpush1.msra.mxu0 %v119
    %323 = vmatprep.mubr.f32.mxu0 %v51
    %324 = vmatmul.mubr.f32.gmra.mrb[0].mxu0 %v50
    %v325 = vpop.f32.mrb[0].mxu0
    %v326 = vadd.f32 %v256, %v325
    %v327 = vpop.f32.mrb[0].mxu0
    %328 = vdwg.mxu0
    %329 = vmatprep.subr.mxu0 0.0
    %330 = vmatpush1.msra.mxu0 %v120
    %331 = vmatprep.subr.mxu0 0.0
    %332 = vmatpush1.msra.mxu0 %v121
    %333 = vmatprep.subr.mxu0 0.0
    %334 = vmatpush1.msra.mxu0 %v122
    %335 = vmatprep.subr.mxu0 0.0
    %336 = vmatpush1.msra.mxu0 %v123
    %337 = vmatprep.subr.mxu0 0.0
    %338 = vmatpush1.msra.mxu0 %v124
    %339 = vmatprep.subr.mxu0 0.0
    %340 = vmatpush1.msra.mxu0 %v125
    %341 = vmatprep.subr.mxu0 0.0
    %342 = vmatpush1.msra.mxu0 %v126
    %343 = vmatprep.subr.mxu0 0.0
    %344 = vmatpush1.msra.mxu0 %v127
    %345 = vmatprep.subr.mxu0 0.0
    %346 = vmatpush1.msra.mxu0 %v128
    %347 = vmatprep.subr.mxu0 0.0
    %348 = vmatpush1.msra.mxu0 %v129
    %349 = vmatprep.subr.mxu0 0.0
    %350 = vmatpush1.msra.mxu0 %v130
    %351 = vmatprep.subr.mxu0 0.0
    %352 = vmatpush1.msra.mxu0 %v131
    %353 = vmatprep.subr.mxu0 0.0
    %354 = vmatpush1.msra.mxu0 %v132
    %355 = vmatprep.subr.mxu0 0.0
    %356 = vmatpush1.msra.mxu0 %v133
    %357 = vmatprep.subr.mxu0 0.0
    %358 = vmatpush1.msra.mxu0 %v134
    %359 = vmatprep.subr.mxu0 0.0
    %360 = vmatpush1.msra.mxu0 %v135
    %361 = vmatprep.subr.mxu0 0.0
    %362 = vmatpush1.msra.mxu0 %v136
    %363 = vmatprep.subr.mxu0 0.0
    %364 = vmatpush1.msra.mxu0 %v137
    %365 = vmatprep.subr.mxu0 0.0
    %366 = vmatpush1.msra.mxu0 %v138
    %367 = vmatprep.subr.mxu0 0.0
    %368 = vmatpush1.msra.mxu0 %v139
    %369 = vmatprep.subr.mxu0 0.0
    %370 = vmatpush1.msra.mxu0 %v140
    %371 = vmatprep.subr.mxu0 0.0
    %372 = vmatpush1.msra.mxu0 %v141
    %373 = vmatprep.subr.mxu0 0.0
    %374 = vmatpush1.msra.mxu0 %v142
    %375 = vmatprep.subr.mxu0 0.0
    %376 = vmatpush1.msra.mxu0 %v143
    %377 = vmatprep.subr.mxu0 0.0
    %378 = vmatpush1.msra.mxu0 %v144
    %379 = vmatprep.subr.mxu0 0.0
    %380 = vmatpush1.msra.mxu0 %v145
    %381 = vmatprep.subr.mxu0 0.0
    %382 = vmatpush1.msra.mxu0 %v146
    %383 = vmatprep.subr.mxu0 0.0
    %384 = vmatpush1.msra.mxu0 %v147
    %385 = vmatprep.subr.mxu0 0.0
    %386 = vmatpush1.msra.mxu0 %v148
    %387 = vmatprep.subr.mxu0 0.0
    %388 = vmatpush1.msra.mxu0 %v149
    %389 = vmatprep.subr.mxu0 0.0
    %390 = vmatpush1.msra.mxu0 %v150
    %391 = vmatprep.subr.mxu0 0.0
    %392 = vmatpush1.msra.mxu0 %v151
    %393 = vmatprep.mubr.f32.mxu0 %v53
    %394 = vmatmul.mubr.f32.gmra.mrb[0].mxu0 %v52
    %v395 = vpop.f32.mrb[0].mxu0
    %v396 = vadd.f32 %v326, %v395
    %v397 = vpop.f32.mrb[0].mxu0
    %398 = vdwg.mxu0
    %399 = vmatprep.subr.mxu0 0.0
    %400 = vmatpush1.msra.mxu0 %v152
    %401 = vmatprep.subr.mxu0 0.0
    %402 = vmatpush1.msra.mxu0 %v153
    %403 = vmatprep.subr.mxu0 0.0
    %404 = vmatpush1.msra.mxu0 %v154
    %405 = vmatprep.subr.mxu0 0.0
    %406 = vmatpush1.msra.mxu0 %v155
    %407 = vmatprep.subr.mxu0 0.0
    %408 = vmatpush1.msra.mxu0 %v156
    %409 = vmatprep.subr.mxu0 0.0
    %410 = vmatpush1.msra.mxu0 %v157
    %411 = vmatprep.subr.mxu0 0.0
    %412 = vmatpush1.msra.mxu0 %v158
    %413 = vmatprep.subr.mxu0 0.0
    %414 = vmatpush1.msra.mxu0 %v159
    %415 = vmatprep.subr.mxu0 0.0
    %416 = vmatpush1.msra.mxu0 %v160
    %417 = vmatprep.subr.mxu0 0.0
    %418 = vmatpush1.msra.mxu0 %v161
    %419 = vmatprep.subr.mxu0 0.0
    %420 = vmatpush1.msra.mxu0 %v162
    %421 = vmatprep.subr.mxu0 0.0
    %422 = vmatpush1.msra.mxu0 %v163
    %423 = vmatprep.subr.mxu0 0.0
    %424 = vmatpush1.msra.mxu0 %v164
    %425 = vmatprep.subr.mxu0 0.0
    %426 = vmatpush1.msra.mxu0 %v165
    %427 = vmatprep.subr.mxu0 0.0
    %428 = vmatpush1.msra.mxu0 %v166
    %429 = vmatprep.subr.mxu0 0.0
    %430 = vmatpush1.msra.mxu0 %v167
    %431 = vmatprep.subr.mxu0 0.0
    %432 = vmatpush1.msra.mxu0 %v168
    %433 = vmatprep.subr.mxu0 0.0
    %434 = vmatpush1.msra.mxu0 %v169
    %435 = vmatprep.subr.mxu0 0.0
    %436 = vmatpush1.msra.mxu0 %v170
    %437 = vmatprep.subr.mxu0 0.0
    %438 = vmatpush1.msra.mxu0 %v171
    %439 = vmatprep.subr.mxu0 0.0
    %440 = vmatpush1.msra.mxu0 %v172
    %441 = vmatprep.subr.mxu0 0.0
    %442 = vmatpush1.msra.mxu0 %v173
    %443 = vmatprep.subr.mxu0 0.0
    %444 = vmatpush1.msra.mxu0 %v174
    %445 = vmatprep.subr.mxu0 0.0
    %446 = vmatpush1.msra.mxu0 %v175
    %447 = vmatprep.subr.mxu0 0.0
    %448 = vmatpush1.msra.mxu0 %v176
    %449 = vmatprep.subr.mxu0 0.0
    %450 = vmatpush1.msra.mxu0 %v177
    %451 = vmatprep.subr.mxu0 0.0
    %452 = vmatpush1.msra.mxu0 %v178
    %453 = vmatprep.subr.mxu0 0.0
    %454 = vmatpush1.msra.mxu0 %v179
    %455 = vmatprep.subr.mxu0 0.0
    %456 = vmatpush1.msra.mxu0 %v180
    %457 = vmatprep.subr.mxu0 0.0
    %458 = vmatpush1.msra.mxu0 %v181
    %459 = vmatprep.subr.mxu0 0.0
    %460 = vmatpush1.msra.mxu0 %v182
    %461 = vmatprep.subr.mxu0 0.0
    %462 = vmatpush1.msra.mxu0 %v183
    %463 = vmatprep.mubr.f32.mxu0 %v55
    %464 = vmatmul.mubr.f32.gmra.mrb[0].mxu0 %v54
    %v465 = vpop.f32.mrb[0].mxu0
    %v466 = vadd.f32 %v396, %v465
    %v467 = vpop.f32.mrb[0].mxu0
    %468 = vdwg.mxu0
    %v469 = vmax.f32 %v466, 0.0
    %v470 = vld [vmem:[#allocation4] sm:$0xff]
    %v471 = vld [vmem:[#allocation4 + $0x8] sm:$0xff]
    %v472 = vld [vmem:[#allocation4 + $0x10] sm:$0xff]
    %v473 = vld [vmem:[#allocation4 + $0x18] sm:$0xff]
    %v474 = vld [vmem:[#allocation4 + $0x20] sm:$0xff]
    %v475 = vld [vmem:[#allocation4 + $0x28] sm:$0xff]
    %v476 = vld [vmem:[#allocation4 + $0x30] sm:$0xff]
    %v477 = vld [vmem:[#allocation4 + $0x38] sm:$0xff]
    %v478 = vld [vmem:[#allocation4 + $0x40] sm:$0xff]
    %v479 = vld [vmem:[#allocation4 + $0x48] sm:$0xff]
    %v480 = vld [vmem:[#allocation4 + $0x50] sm:$0xff]
    %v481 = vld [vmem:[#allocation4 + $0x58] sm:$0xff]
    %v482 = vld [vmem:[#allocation4 + $0x60] sm:$0xff]
    %v483 = vld [vmem:[#allocation4 + $0x68] sm:$0xff]
    %v484 = vld [vmem:[#allocation4 + $0x70] sm:$0xff]
    %v485 = vld [vmem:[#allocation4 + $0x78] sm:$0xff]
    %v486 = vld [vmem:[%s4 + $0x1] sm:$0x1]
    %v487 = vlaneseq
    %v488 = vshrl.u32 %v487, 7
    %v489 = vsub.s32 0, %v488
    %v490 = vrot.slane %v486, %v489
    %491 = vmatprep.subr.mxu0 0.0
    %492 = vmatpush1.msra.mxu0 %v470
    %493 = vmatprep.subr.mxu0 0.0
    %494 = vmatpush1.msra.mxu0 %v471
    %495 = vmatprep.subr.mxu0 0.0
    %496 = vmatpush1.msra.mxu0 %v472
    %497 = vmatprep.subr.mxu0 0.0
    %498 = vmatpush1.msra.mxu0 %v473
    %499 = vmatprep.subr.mxu0 0.0
    %500 = vmatpush1.msra.mxu0 %v474
    %501 = vmatprep.subr.mxu0 0.0
    %502 = vmatpush1.msra.mxu0 %v475
    %503 = vmatprep.subr.mxu0 0.0
    %504 = vmatpush1.msra.mxu0 %v476
    %505 = vmatprep.subr.mxu0 0.0
    %506 = vmatpush1.msra.mxu0 %v477
    %507 = vmatprep.subr.mxu0 0.0
    %508 = vmatpush1.msra.mxu0 %v478
    %509 = vmatprep.subr.mxu0 0.0
    %510 = vmatpush1.msra.mxu0 %v479
    %511 = vmatprep.subr.mxu0 0.0
    %512 = vmatpush1.msra.mxu0 %v480
    %513 = vmatprep.subr.mxu0 0.0
    %514 = vmatpush1.msra.mxu0 %v481
    %515 = vmatprep.subr.mxu0 0.0
    %516 = vmatpush1.msra.mxu0 %v482
    %517 = vmatprep.subr.mxu0 0.0
    %518 = vmatpush1.msra.mxu0 %v483
    %519 = vmatprep.subr.mxu0 0.0
    %520 = vmatpush1.msra.mxu0 %v484
    %521 = vmatprep.subr.mxu0 0.0
    %522 = vmatpush1.msra.mxu0 %v485
    %523 = vmatprep.subr.mxu0 0.0
    %524 = vmatpush1.msra.mxu0 0.0
    %525 = vmatprep.subr.mxu0 0.0
    %526 = vmatpush1.msra.mxu0 0.0
    %527 = vmatprep.subr.mxu0 0.0
    %528 = vmatpush1.msra.mxu0 0.0
    %529 = vmatprep.subr.mxu0 0.0
    %530 = vmatpush1.msra.mxu0 0.0
    %531 = vmatprep.subr.mxu0 0.0
    %532 = vmatpush1.msra.mxu0 0.0
    %533 = vmatprep.subr.mxu0 0.0
    %534 = vmatpush1.msra.mxu0 0.0
    %535 = vmatprep.subr.mxu0 0.0
    %536 = vmatpush1.msra.mxu0 0.0
    %537 = vmatprep.subr.mxu0 0.0
    %538 = vmatpush1.msra.mxu0 0.0
    %539 = vmatprep.subr.mxu0 0.0
    %540 = vmatpush1.msra.mxu0 0.0
    %541 = vmatprep.subr.mxu0 0.0
    %542 = vmatpush1.msra.mxu0 0.0
    %543 = vmatprep.subr.mxu0 0.0
    %544 = vmatpush1.msra.mxu0 0.0
    %545 = vmatprep.subr.mxu0 0.0
    %546 = vmatpush1.msra.mxu0 0.0
    %547 = vmatprep.subr.mxu0 0.0
    %548 = vmatpush1.msra.mxu0 0.0
    %549 = vmatprep.subr.mxu0 0.0
    %550 = vmatpush1.msra.mxu0 0.0
    %551 = vmatprep.subr.mxu0 0.0
    %552 = vmatpush1.msra.mxu0 0.0
    %553 = vmatprep.subr.mxu0 0.0
    %554 = vmatpush1.msra.mxu0 0.0
    %555 = vmatprep.mubr.f32.mxu0 0.0
    %556 = vmatmul.mubr.f32.gmra.mrb[0].mxu0 %v469
    %v557 = vpop.f32.mrb[0].mxu0
    %v558 = vadd.f32 %v490, %v557
    %v559 = vpop.f32.mrb[0].mxu0
    %560 = vdwg.mxu0
    %v561 = vmax.f32 %v558, 0.0
    %v562 = vld [vmem:[%s3] sm:$0xff]
    %v563 = vld [vmem:[%s3 + $0x8] sm:$0xff]
    %v564 = vld [vmem:[%s3 + $0x10] sm:$0xff]
    %v565 = vld [vmem:[%s3 + $0x18] sm:$0xff]
    %v566 = vld [vmem:[%s3 + $0x20] sm:$0xff]
    %v567 = vld [vmem:[%s3 + $0x28] sm:$0xff]
    %v568 = vld [vmem:[%s3 + $0x30] sm:$0xff]
    %v569 = vld [vmem:[%s3 + $0x38] sm:$0xff]
    %v570 = vld [vmem:[%s3 + $0x40] sm:$0xff]
    %v571 = vld [vmem:[%s3 + $0x48] sm:$0xff]
    %v572 = vld [vmem:[%s3 + $0x50] sm:$0xff]
    %v573 = vld [vmem:[%s3 + $0x58] sm:$0xff]
    %v574 = vld [vmem:[%s3 + $0x60] sm:$0xff]
    %v575 = vld [vmem:[%s3 + $0x68] sm:$0xff]
    %v576 = vld [vmem:[%s3 + $0x70] sm:$0xff]
    %v577 = vld [vmem:[%s3 + $0x78] sm:$0xff]
    %v578 = vld [vmem:[%s4 + $0x2] sm:$0x1]
    %v579 = vlaneseq
    %v580 = vshrl.u32 %v579, 7
    %v581 = vsub.s32 0, %v580
    %v582 = vrot.slane %v578, %v581
    %583 = vmatprep.subr.mxu0 0.0
    %584 = vmatpush1.msra.mxu0 %v562
    %585 = vmatprep.subr.mxu0 0.0
    %586 = vmatpush1.msra.mxu0 %v563
    %587 = vmatprep.subr.mxu0 0.0
    %588 = vmatpush1.msra.mxu0 %v564
    %589 = vmatprep.subr.mxu0 0.0
    %590 = vmatpush1.msra.mxu0 %v565
    %591 = vmatprep.subr.mxu0 0.0
    %592 = vmatpush1.msra.mxu0 %v566
    %593 = vmatprep.subr.mxu0 0.0
    %594 = vmatpush1.msra.mxu0 %v567
    %595 = vmatprep.subr.mxu0 0.0
    %596 = vmatpush1.msra.mxu0 %v568
    %597 = vmatprep.subr.mxu0 0.0
    %598 = vmatpush1.msra.mxu0 %v569
    %599 = vmatprep.subr.mxu0 0.0
    %600 = vmatpush1.msra.mxu0 %v570
    %601 = vmatprep.subr.mxu0 0.0
    %602 = vmatpush1.msra.mxu0 %v571
    %603 = vmatprep.subr.mxu0 0.0
    %604 = vmatpush1.msra.mxu0 %v572
    %605 = vmatprep.subr.mxu0 0.0
    %606 = vmatpush1.msra.mxu0 %v573
    %607 = vmatprep.subr.mxu0 0.0
    %608 = vmatpush1.msra.mxu0 %v574
    %609 = vmatprep.subr.mxu0 0.0
    %610 = vmatpush1.msra.mxu0 %v575
    %611 = vmatprep.subr.mxu0 0.0
    %612 = vmatpush1.msra.mxu0 %v576
    %613 = vmatprep.subr.mxu0 0.0
    %614 = vmatpush1.msra.mxu0 %v577
    %615 = vmatprep.subr.mxu0 0.0
    %616 = vmatpush1.msra.mxu0 0.0
    %617 = vmatprep.subr.mxu0 0.0
    %618 = vmatpush1.msra.mxu0 0.0
    %619 = vmatprep.subr.mxu0 0.0
    %620 = vmatpush1.msra.mxu0 0.0
    %621 = vmatprep.subr.mxu0 0.0
    %622 = vmatpush1.msra.mxu0 0.0
    %623 = vmatprep.subr.mxu0 0.0
    %624 = vmatpush1.msra.mxu0 0.0
    %625 = vmatprep.subr.mxu0 0.0
    %626 = vmatpush1.msra.mxu0 0.0
    %627 = vmatprep.subr.mxu0 0.0
    %628 = vmatpush1.msra.mxu0 0.0
    %629 = vmatprep.subr.mxu0 0.0
    %630 = vmatpush1.msra.mxu0 0.0
    %631 = vmatprep.subr.mxu0 0.0
    %632 = vmatpush1.msra.mxu0 0.0
    %633 = vmatprep.subr.mxu0 0.0
    %634 = vmatpush1.msra.mxu0 0.0
    %635 = vmatprep.subr.mxu0 0.0
    %636 = vmatpush1.msra.mxu0 0.0
    %637 = vmatprep.subr.mxu0 0.0
    %638 = vmatpush1.msra.mxu0 0.0
    %639 = vmatprep.subr.mxu0 0.0
    %640 = vmatpush1.msra.mxu0 0.0
    %641 = vmatprep.subr.mxu0 0.0
    %642 = vmatpush1.msra.mxu0 0.0
    %643 = vmatprep.subr.mxu0 0.0
    %644 = vmatpush1.msra.mxu0 0.0
    %645 = vmatprep.subr.mxu0 0.0
    %646 = vmatpush1.msra.mxu0 0.0
    %647 = vmatprep.mubr.f32.mxu0 0.0
    %648 = vmatmul.mubr.f32.gmra.mrb[0].mxu0 %v561
    %v649 = vpop.f32.mrb[0].mxu0
    %v650 = vadd.f32 %v582, %v649
    %v651 = vpop.f32.mrb[0].mxu0
    %652 = vdwg.mxu0
    %653 = vst [vmem:[%s5] sm:$0xff] %v650
    // Predicated region
    $region30: #{_lambda_.1} parent=1 // pred_check
      _
    $region31: #{_lambda_.1} parent=1 // pred_check_branch
      %655 = sbr.rel (0) target = $region33
    $region32: #{_lambda_.1} parent=1 // pred_region
      _
    $region33: #{_lambda_.1} parent=1 // pred_fallthru
      _
    // Predicated region
    $region34: #{_lambda_.1} parent=1 // pred_check
      _
    $region35: #{_lambda_.1} parent=1 // pred_check_branch
      %657 = sbr.rel (0) target = $region37
    $region36: #{_lambda_.1} parent=1 // pred_region
      _
    $region37: #{_lambda_.1} parent=1 // pred_fallthru
      _
    %658 = vsyncpa [#allocation3], 1
    %659 = vsyncpa [#allocation5], 1

</llo_original>
